<compile_context>
chip_gen: v6e
topology: v6e:2x2x1
jax: 0.10.0
libtpu: 0.0.40
codegen_flags: <defaults>
</compile_context>

<pallas_src>
import functools

import jax
import jax.numpy as jnp
from jax.experimental import pallas as pl
from jax.experimental.pallas import tpu as pltpu


def _l2pool_kernel(xe_ref, xop_ref, o_ref, *, a0, a1, a2, eps):
    # xe_ref : (H, Wo, Cb)     even input columns  (w = 2*wo)
    # xop_ref: (H, Wo+1, Cb)   odd input columns with a leading zero column,
    #                          so sublane index wo holds column (2*wo - 1)
    # o_ref  : (Ho, Wo, Cb)    pooled output, Ho = H // 2
    xe = xe_ref[...]
    xop = xop_ref[...]

    H, Wo, Cb = xe.shape
    Ho = H // 2

    # input ** 2 (VPU)
    e2 = xe * xe                       # column 2*wo
    o2 = xop * xop                     # column 2*wo - 1 at index wo

    o2_left = o2[:, :Wo, :]            # column 2*wo - 1
    o2_right = o2[:, 1:, :]            # column 2*wo + 1

    # horizontal 3-tap conv, stride 2 (separable normalized hanning taps)
    h = a0 * o2_left + a1 * e2 + a2 * o2_right            # (H, Wo, Cb)

    # vertical 3-tap conv, stride 2: split rows into (Ho, 2) via a pure
    # leading-dim reshape (no sublane/lane relayout), shift along axis 0.
    hr = h.reshape(Ho, 2, Wo, Cb)
    h_even = hr[:, 0]                  # row 2*ho
    h_odd = hr[:, 1]                   # row 2*ho + 1
    h_up = jnp.concatenate(            # row 2*ho - 1 (zero row at ho = 0)
        [jnp.zeros_like(h_odd[:1]), h_odd[:Ho - 1]], axis=0)

    out = a0 * h_up + a1 * h_even + a2 * h_odd
    o_ref[...] = jnp.sqrt(out + eps).astype(o_ref.dtype)


def _pick_channel_block(C):
    for cb in (256, 128):
        if C % cb == 0:
            return cb
    return C


def l2pooling(x, *, filter_size=5, stride=2, pad_off=0):
    """L2pooling.forward for an NCHW float input (module default hyperparams)."""
    # TODO(synk): kernel is specialized to the module defaults (3-tap hanning
    # filter, stride 2, padding 1) and even spatial dims; other configs would
    # need a generalized tap decomposition.
    assert filter_size == 5 and stride == 2 and pad_off == 0
    N, C, H, W = x.shape
    assert H % 2 == 0 and W % 2 == 0, "even spatial dims expected"
    Ho, Wo = H // 2, W // 2

    # normalized separable hanning taps: hanning(5)[1:-1] = [.5, 1, .5];
    # outer(a, a)/sum == (a/2) ⊗ (a/2) -> taps (0.25, 0.5, 0.25), exact in f32.
    a0, a1, a2 = 0.25, 0.5, 0.25

    # Layout plumbing in XLA (outside the kernel).
    x_nhwc = jnp.transpose(x, (0, 2, 3, 1))               # (N, H, W, C)
    x_even = x_nhwc[:, :, 0::2, :]                        # (N, H, Wo, C)
    x_odd = x_nhwc[:, :, 1::2, :]                         # (N, H, Wo, C)
    zero_col = jnp.zeros((N, H, 1, C), x.dtype)
    x_oddp = jnp.concatenate([zero_col, x_odd], axis=2)   # (N, H, Wo+1, C)

    Cb = _pick_channel_block(C)
    grid = (N, C // Cb)

    kernel = functools.partial(_l2pool_kernel, a0=a0, a1=a1, a2=a2, eps=1e-12)

    out_nhwc = pl.pallas_call(
        kernel,
        out_shape=jax.ShapeDtypeStruct((N, Ho, Wo, C), x.dtype),
        grid=grid,
        in_specs=[
            pl.BlockSpec((None, H, Wo, Cb), lambda n, c: (n, 0, 0, c)),
            pl.BlockSpec((None, H, Wo + 1, Cb), lambda n, c: (n, 0, 0, c)),
        ],
        out_specs=pl.BlockSpec((None, Ho, Wo, Cb), lambda n, c: (n, 0, 0, c)),
        compiler_params=pltpu.CompilerParams(
            dimension_semantics=("parallel", "parallel")),
    )(x_even, x_oddp)

    return jnp.transpose(out_nhwc, (0, 3, 1, 2))          # back to NCHW


def _reference(x):
    """Pure-JAX mirror of the PyTorch L2pooling.forward (NCHW)."""
    C = x.shape[1]
    a = jnp.array([0.25, 0.5, 0.25], jnp.float32)
    g = jnp.outer(a, a)                                   # (3, 3), sums to 1
    filt = jnp.broadcast_to(g, (C, 1, 3, 3)).astype(x.dtype)
    y = jax.lax.conv_general_dilated(
        x * x, filt, window_strides=(2, 2), padding=((1, 1), (1, 1)),
        dimension_numbers=("NCHW", "OIHW", "NCHW"), feature_group_count=C)
    return jnp.sqrt(y + 1e-12)


if __name__ == "__main__":
    # Small but TPU-shaped example: batch=2, channels=64 (VGG-like feature
    # map, lane-friendly), spatial 16x16 -> output 8x8.
    N, C, H, W = 2, 64, 16, 16
    key = jax.random.PRNGKey(0)
    x = jax.random.normal(key, (N, C, H, W), dtype=jnp.float32)

    y = l2pooling(x)
    y = jax.block_until_ready(y)

    y_ref = _reference(x)
    assert y.shape == (N, C, H // 2, W // 2)
    assert jnp.allclose(y, y_ref, atol=1e-4, rtol=1e-4), "mismatch vs reference"

    print("KERNEL_OK")
</pallas_src>

<mosaic_0001>
module attributes {stable_mosaic.version = 11 : i64} {
  func.func @_l2pool_kernel(%arg0: i32, %arg1: i32, %arg2: memref<1x16x8x64xf32, #tpu.memory_space<vmem>>, %arg3: memref<1x16x9x64xf32, #tpu.memory_space<vmem>>, %arg4: memref<1x8x8x64xf32, #tpu.memory_space<vmem>>) attributes {dimension_semantics = [#tpu.dimension_semantics<parallel>, #tpu.dimension_semantics<parallel>], iteration_bounds = array<i64: 2, 1>, scalar_prefetch = 0 : i64, scratch_operands = 0 : i64, tpu.core_type = #tpu.core_type<tc>, window_params = [{transform_indices = @transform_0, window_bounds = array<i64: 1, 16, 8, 64>}, {transform_indices = @transform_1, window_bounds = array<i64: 1, 16, 9, 64>}, {transform_indices = @transform_2, window_bounds = array<i64: 1, 8, 8, 64>}]} {
    %c0 = arith.constant 0 : index
    %c0_0 = arith.constant 0 : index
    %c0_1 = arith.constant 0 : index
    %c0_2 = arith.constant 0 : index
    %0 = vector.load %arg2[%c0, %c0_0, %c0_1, %c0_2] : memref<1x16x8x64xf32, #tpu.memory_space<vmem>>, vector<1x16x8x64xf32>
    %1 = vector.shape_cast %0 : vector<1x16x8x64xf32> to vector<16x8x64xf32>
    %c0_3 = arith.constant 0 : index
    %c0_4 = arith.constant 0 : index
    %c0_5 = arith.constant 0 : index
    %c0_6 = arith.constant 0 : index
    %2 = vector.load %arg3[%c0_3, %c0_4, %c0_5, %c0_6] : memref<1x16x9x64xf32, #tpu.memory_space<vmem>>, vector<1x16x9x64xf32>
    %3 = vector.shape_cast %2 : vector<1x16x9x64xf32> to vector<16x9x64xf32>
    %4 = arith.mulf %1, %1 : vector<16x8x64xf32>
    %5 = arith.mulf %3, %3 : vector<16x9x64xf32>
    %6 = vector.extract_strided_slice %5 {offsets = [0, 0, 0], sizes = [16, 8, 64], strides = [1, 1, 1]} : vector<16x9x64xf32> to vector<16x8x64xf32>
    %7 = vector.extract_strided_slice %5 {offsets = [0, 1, 0], sizes = [16, 8, 64], strides = [1, 1, 1]} : vector<16x9x64xf32> to vector<16x8x64xf32>
    %cst = arith.constant 2.500000e-01 : f32
    %8 = vector.broadcast %cst : f32 to vector<16x8x64xf32>
    %9 = arith.mulf %8, %6 : vector<16x8x64xf32>
    %cst_7 = arith.constant 5.000000e-01 : f32
    %10 = vector.broadcast %cst_7 : f32 to vector<16x8x64xf32>
    %11 = arith.mulf %10, %4 : vector<16x8x64xf32>
    %12 = arith.addf %9, %11 : vector<16x8x64xf32>
    %cst_8 = arith.constant 2.500000e-01 : f32
    %13 = vector.broadcast %cst_8 : f32 to vector<16x8x64xf32>
    %14 = arith.mulf %13, %7 : vector<16x8x64xf32>
    %15 = arith.addf %12, %14 : vector<16x8x64xf32>
    %16 = vector.shape_cast %15 : vector<16x8x64xf32> to vector<8x2x8x64xf32>
    %17 = vector.extract_strided_slice %16 {offsets = [0, 0, 0, 0], sizes = [8, 1, 8, 64], strides = [1, 1, 1, 1]} : vector<8x2x8x64xf32> to vector<8x1x8x64xf32>
    %18 = vector.shape_cast %17 : vector<8x1x8x64xf32> to vector<8x8x64xf32>
    %19 = vector.extract_strided_slice %16 {offsets = [0, 1, 0, 0], sizes = [8, 1, 8, 64], strides = [1, 1, 1, 1]} : vector<8x2x8x64xf32> to vector<8x1x8x64xf32>
    %20 = vector.shape_cast %19 : vector<8x1x8x64xf32> to vector<8x8x64xf32>
    %cst_9 = arith.constant 0.000000e+00 : f32
    %21 = vector.broadcast %cst_9 : f32 to vector<1x8x64xf32>
    %22 = vector.extract_strided_slice %20 {offsets = [0, 0, 0], sizes = [7, 8, 64], strides = [1, 1, 1]} : vector<8x8x64xf32> to vector<7x8x64xf32>
    %23 = tpu.concatenate %21, %22 in 0 : vector<1x8x64xf32>, vector<7x8x64xf32> -> vector<8x8x64xf32>
    %cst_10 = arith.constant 2.500000e-01 : f32
    %24 = vector.broadcast %cst_10 : f32 to vector<8x8x64xf32>
    %25 = arith.mulf %24, %23 : vector<8x8x64xf32>
    %cst_11 = arith.constant 5.000000e-01 : f32
    %26 = vector.broadcast %cst_11 : f32 to vector<8x8x64xf32>
    %27 = arith.mulf %26, %18 : vector<8x8x64xf32>
    %28 = arith.addf %25, %27 : vector<8x8x64xf32>
    %cst_12 = arith.constant 2.500000e-01 : f32
    %29 = vector.broadcast %cst_12 : f32 to vector<8x8x64xf32>
    %30 = arith.mulf %29, %20 : vector<8x8x64xf32>
    %31 = arith.addf %28, %30 : vector<8x8x64xf32>
    %cst_13 = arith.constant 9.99999996E-13 : f32
    %32 = vector.broadcast %cst_13 : f32 to vector<8x8x64xf32>
    %33 = arith.addf %31, %32 : vector<8x8x64xf32>
    %34 = math.sqrt %33 : vector<8x8x64xf32>
    %c0_14 = arith.constant 0 : index
    %c0_15 = arith.constant 0 : index
    %c0_16 = arith.constant 0 : index
    %c0_17 = arith.constant 0 : index
    %35 = vector.load %arg4[%c0_14, %c0_15, %c0_16, %c0_17] : memref<1x8x8x64xf32, #tpu.memory_space<vmem>>, vector<1x8x8x64xf32>
    %36 = vector.shape_cast %35 : vector<1x8x8x64xf32> to vector<8x8x64xf32>
    %37 = vector.shape_cast %34 : vector<8x8x64xf32> to vector<1x8x8x64xf32>
    tpu.vector_store %arg4[%c0_14, %c0_15, %c0_16, %c0_17], %37 {strides = array<i32>} : memref<1x8x8x64xf32, #tpu.memory_space<vmem>>, vector<1x8x8x64xf32>,
    return
  }
  func.func @transform_0(%arg0: i32, %arg1: i32) -> (i32, i32, i32, i32) {
    %c0_i32 = arith.constant 0 : i32
    %c0_i32_0 = arith.constant 0 : i32
    %c0_i32_1 = arith.constant 0 : i32
    return %arg0, %c0_i32, %c0_i32_0, %arg1 : i32, i32, i32, i32
  }
  func.func @transform_1(%arg0: i32, %arg1: i32) -> (i32, i32, i32, i32) {
    %c0_i32 = arith.constant 0 : i32
    %c0_i32_0 = arith.constant 0 : i32
    %c0_i32_1 = arith.constant 0 : i32
    return %arg0, %c0_i32, %c0_i32_0, %arg1 : i32, i32, i32, i32
  }
  func.func @transform_2(%arg0: i32, %arg1: i32) -> (i32, i32, i32, i32) {
    %c0_i32 = arith.constant 0 : i32
    %c0_i32_0 = arith.constant 0 : i32
    %c0_i32_1 = arith.constant 0 : i32
    return %arg0, %c0_i32, %c0_i32_0, %arg1 : i32, i32, i32, i32
  }
}

</mosaic_0001>

<llo_original>
// kernel: tpu_custom_call.1
$region0: #{tpu_custom_call.1}
  #allocation0 [shape = 'u32[]', space=smem, size = 0x4, offset = 0x4, fixed_abs, tag = 'smem constant byte address 0x4 - core index']
  #allocation1 [shape = 'u32[144,128]{1,0:T(1,128)}', space=vmem, size = 0x12000, scoped, tag = 'internal scratch']
  %s0 = inlined_call_operand.vmem [shape: f32[2,16,8,64], index: 0, kind: input, shape index: {}]
  %s1 = inlined_call_operand.vmem [shape: f32[2,16,9,64], index: 1, kind: input, shape index: {}]
  %s2 = inlined_call_operand.hbm [shape: f32[2,8,8,64], index: 2, kind: output, shape index: {}]
  %s3 = sld [smem:[#allocation0]]
  $region41: #{tpu_custom_call.1} parent=0
    _
  %s5 = ssub.s32 1, %s3
  %s6 = scalar_select 0, %s5, %s3
  $region1: #{tpu_custom_call.1} parent=0
    #allocation2 [shape = 'u8[65536]{0}', space=vmem, size = 0x10000, scoped, tag = 'output window, operand 0']
    #allocation3 [shape = 's32[2]{0}', space=sflag, size = 0x8, scoped, tag = 'scoped memory for tpu_custom_call.1']
    %7 = vsyncpa [#allocation3], 0
    %s8 = scalar_lea.sflag [#allocation3], 1
    %9 = vsyncpa %s8, 0
    loop: start=0, step=1, limit=4
    $region2: #{tpu_custom_call.1} parent=1 // loop_pre_header
      _
    $region3: #{tpu_custom_call.1} parent=1 // loop_header
      %s11 = sphi 0, %s15
      %p12 = scmp.ge.s32.totalorder %s11, 4
      %s18 = sphi 0, %s30
      %s19 = sphi 0, %s26
      %s20 = sphi 0, %s18
      %s21 = sphi 0, %s19
      %s22 = sphi 0, %s20
      %s23 = sphi 0, %s21
      %s35 = sphi 0, %s37
      %s38 = sphi 0, %s35
      %s39 = sphi 0, %s38
      %s55 = sphi 0, %s39
      %s63 = sphi 0, %s65
      %s66 = sphi 0, %s63
      %s67 = sphi 0, %s66
      %s83 = sphi 0, %s67
      %s91 = sphi 0, %s93
      %s94 = sphi 0, %s91
      %s95 = sphi 0, %s94
      %s111 = sphi 0, %s95
    $region4: #{tpu_custom_call.1} parent=1 // loop_header_branch
      %14 = sbr.rel (%p12) target = $region8
    $region5: #{tpu_custom_call.1} parent=1 // loop_body
      %s16 = ssub.s32 %s11, 1
      %s17 = ssub.s32 %s11, 2
      %s24 = sadd.s32 1, %s19
      %p25 = scmp.ge.s32.totalorder %s24, 1
      %s26 = scalar_select %p25, 0, %s24
      %s27 = sadd.s32 1, %s18
      %s28 = scalar_select %p25, %s27, %s18
      %p29 = scmp.ge.s32.totalorder %s28, 2
      %s30 = scalar_select %p29, 0, %s28
      %s31 = ssub.s32 %s18, %s30
      %s32 = ssub.s32 %s19, %s26
      %s33 = sor.u32 %s31, %s32
      %p34 = scmp.eq.s32.totalorder %s33, 0
      %s36 = sadd.s32 %s35, 1
      %s37 = scalar_select %p34, %s35, %s36
      %p40 = pneg %p34
      %p41 = scmp.eq.s32.totalorder %s11, 1
      %p42 = por %p40, %p41
      %p43 = scmp.ne.s32.totalorder %s35, %s38
      %p44 = scmp.eq.s32.totalorder %s11, 0
      %p45 = por %p43, %p44
      %p46 = scmp.ne.s32.totalorder %s35, %s38
      %p47 = scmp.eq.s32.totalorder %s16, 1
      %p48 = por %p46, %p47
      %p49 = scmp.ne.s32.totalorder %s38, %s39
      %p50 = scmp.eq.s32.totalorder %s16, 0
      %p51 = por %p49, %p50
      %p52 = scmp.ne.s32.totalorder %s38, %s39
      %p53 = scmp.eq.s32.totalorder %s17, 1
      %p54 = por %p52, %p53
      %p56 = scmp.ne.s32.totalorder %s39, %s55
      %p57 = scmp.eq.s32.totalorder %s17, 0
      %p58 = por %p56, %p57
      %s59 = ssub.s32 %s18, %s30
      %s60 = ssub.s32 %s19, %s26
      %s61 = sor.u32 %s59, %s60
      %p62 = scmp.eq.s32.totalorder %s61, 0
      %s64 = sadd.s32 %s63, 1
      %s65 = scalar_select %p62, %s63, %s64
      %p68 = pneg %p62
      %p69 = scmp.eq.s32.totalorder %s11, 1
      %p70 = por %p68, %p69
      %p71 = scmp.ne.s32.totalorder %s63, %s66
      %p72 = scmp.eq.s32.totalorder %s11, 0
      %p73 = por %p71, %p72
      %p74 = scmp.ne.s32.totalorder %s63, %s66
      %p75 = scmp.eq.s32.totalorder %s16, 1
      %p76 = por %p74, %p75
      %p77 = scmp.ne.s32.totalorder %s66, %s67
      %p78 = scmp.eq.s32.totalorder %s16, 0
      %p79 = por %p77, %p78
      %p80 = scmp.ne.s32.totalorder %s66, %s67
      %p81 = scmp.eq.s32.totalorder %s17, 1
      %p82 = por %p80, %p81
      %p84 = scmp.ne.s32.totalorder %s67, %s83
      %p85 = scmp.eq.s32.totalorder %s17, 0
      %p86 = por %p84, %p85
      %s87 = ssub.s32 %s18, %s30
      %s88 = ssub.s32 %s19, %s26
      %s89 = sor.u32 %s87, %s88
      %p90 = scmp.eq.s32.totalorder %s89, 0
      %s92 = sadd.s32 %s91, 1
      %s93 = scalar_select %p90, %s91, %s92
      %p96 = pneg %p90
      %p97 = scmp.eq.s32.totalorder %s11, 1
      %p98 = por %p96, %p97
      %p99 = scmp.ne.s32.totalorder %s91, %s94
      %p100 = scmp.eq.s32.totalorder %s11, 0
      %p101 = por %p99, %p100
      %p102 = scmp.ne.s32.totalorder %s91, %s94
      %p103 = scmp.eq.s32.totalorder %s16, 1
      %p104 = por %p102, %p103
      %p105 = scmp.ne.s32.totalorder %s94, %s95
      %p106 = scmp.eq.s32.totalorder %s16, 0
      %p107 = por %p105, %p106
      %p108 = scmp.ne.s32.totalorder %s94, %s95
      %p109 = scmp.eq.s32.totalorder %s17, 1
      %p110 = por %p108, %p109
      %p112 = scmp.ne.s32.totalorder %s95, %s111
      %p113 = scmp.eq.s32.totalorder %s17, 0
      %p114 = por %p112, %p113
      %p115 = scmp.le.s32.totalorder 1, %s11
      %p116 = scmp.lt.s32.totalorder %s11, 3
      %p117 = pnand %p115, %p116
      %p118 = pneg %p117
      // Predicated region
      $region9: #{tpu_custom_call.1} parent=5 // pred_check
        _
      $region10: #{tpu_custom_call.1} parent=5 // pred_check_branch
        %120 = sbr.rel (%p117) target = $region12
      $region11: #{tpu_custom_call.1} parent=5 // pred_region
        %s121 = ssub.s32 %s11, 1
      $region12: #{tpu_custom_call.1} parent=5 // pred_fallthru
        _
      %p122 = scmp.lt.s32.totalorder %s11, 2
      // Predicated region
      $region13: #{tpu_custom_call.1} parent=5 // pred_check
        %p123 = pneg %p122
      $region14: #{tpu_custom_call.1} parent=5 // pred_check_branch
        %125 = sbr.rel (%p123) target = $region16
      $region15: #{tpu_custom_call.1} parent=5 // pred_region
        // Predicated region
        $region17: #{tpu_custom_call.1} parent=15 // pred_check
          %p126 = pneg %p45
        $region18: #{tpu_custom_call.1} parent=15 // pred_check_branch
          %128 = sbr.rel (%p126) target = $region20
        $region19: #{tpu_custom_call.1} parent=15 // pred_region
          %p129 = scmp.lt.s32.totalorder %s18, 1
          %s130 = scalar_select %p129, %s18, 1
          %p131 = scmp.lt.s32.totalorder %s19, 0
          %s132 = scalar_select %p131, %s19, 0
          %s133 = smul.addr %s130, 16
          %s134 = sadd.s32 %s132, %s133
          %s135 = smul.addr %s134, 8
          %s136 = scalar_lea.vmem %s0, %s135
        $region20: #{tpu_custom_call.1} parent=15 // pred_fallthru
          _
        // Predicated region
        $region21: #{tpu_custom_call.1} parent=15 // pred_check
          %p137 = pneg %p73
        $region22: #{tpu_custom_call.1} parent=15 // pred_check_branch
          %139 = sbr.rel (%p137) target = $region24
        $region23: #{tpu_custom_call.1} parent=15 // pred_region
          %p140 = scmp.lt.s32.totalorder %s18, 1
          %s141 = scalar_select %p140, %s18, 1
          %p142 = scmp.lt.s32.totalorder %s19, 0
          %s143 = scalar_select %p142, %s19, 0
          %s144 = smul.addr %s141, 32
          %s145 = sadd.s32 %s143, %s144
          %s146 = smul.addr %s145, 8
          %s147 = scalar_lea.vmem %s1, %s146
        $region24: #{tpu_custom_call.1} parent=15 // pred_fallthru
          _
      $region16: #{tpu_custom_call.1} parent=5 // pred_fallthru
        _
      %p148 = scmp.le.s32.totalorder 1, %s11
      %p149 = scmp.lt.s32.totalorder %s11, 3
      %p150 = pnand %p148, %p149
      %p151 = pneg %p150
      // Predicated region
      $region25: #{tpu_custom_call.1} parent=5 // pred_check
        _
      $region26: #{tpu_custom_call.1} parent=5 // pred_check_branch
        %153 = sbr.rel (%p150) target = $region28
      $region27: #{tpu_custom_call.1} parent=5 // pred_region
        %s154 = ssub.s32 %s11, 1
        %p155 = scmp.lt.s32.totalorder %s20, 1
        %s156 = scalar_select %p155, %s20, 1
        %p157 = scmp.lt.s32.totalorder %s21, 0
        %s158 = scalar_select %p157, %s21, 0
        %s159 = smul.addr %s156, 16
        %s160 = sadd.s32 %s158, %s159
        %s161 = smul.addr %s160, 8
        %s162 = scalar_lea.vmem %s0, %s161
        %p163 = pneg %p51
        %p164 = pneg %p48
        %p165 = scmp.lt.s32.totalorder %s20, 1
        %s166 = scalar_select %p165, %s20, 1
        %p167 = scmp.lt.s32.totalorder %s21, 0
        %s168 = scalar_select %p167, %s21, 0
        %s169 = smul.addr %s166, 32
        %s170 = sadd.s32 %s168, %s169
        %s171 = smul.addr %s170, 8
        %s172 = scalar_lea.vmem %s1, %s171
        %p173 = pneg %p79
        %p174 = pneg %p76
        %p175 = pneg %p107
        %p176 = pneg %p104
        %s177 = sand.u32 %s94, 1
        %s178 = scalar_lea.sflag [#allocation3], %s177
        %s179 = sand.u32 %s94, 1
        %s180 = smul.addr %s179, 64
        %s181 = scalar_lea.vmem [#allocation2], %s180
        %p182 = scmp.lt.s32.totalorder %s20, 1
        %s183 = scalar_select %p182, %s20, 1
        %p184 = scmp.lt.s32.totalorder %s21, 0
        %s185 = scalar_select %p184, %s21, 0
        %s186 = smul.addr %s183, 16
        %s187 = sadd.s32 %s185, %s186
        %s188 = smul.addr %s187, 8
        %s189 = scalar_lea.vmem %s0, %s188
        %p190 = scmp.lt.s32.totalorder %s20, 1
        %s191 = scalar_select %p190, %s20, 1
        %p192 = scmp.lt.s32.totalorder %s21, 0
        %s193 = scalar_select %p192, %s21, 0
        %s194 = smul.addr %s191, 32
        %s195 = sadd.s32 %s193, %s194
        %s196 = smul.addr %s195, 8
        %s197 = scalar_lea.vmem %s1, %s196
        %v198 = vld [vmem:[%s189] sm:$0xff]
        %v199 = vld [vmem:[%s189 + $0x8] sm:$0xff]
        %v200 = vld [vmem:[%s189 + $0x10] sm:$0xff]
        %v201 = vld [vmem:[%s189 + $0x18] sm:$0xff]
        %v202 = vld [vmem:[%s189 + $0x20] sm:$0xff]
        %v203 = vld [vmem:[%s189 + $0x28] sm:$0xff]
        %v204 = vld [vmem:[%s189 + $0x30] sm:$0xff]
        %v205 = vld [vmem:[%s189 + $0x38] sm:$0xff]
        %v206 = vld [vmem:[%s189 + $0x40] sm:$0xff]
        %v207 = vld [vmem:[%s189 + $0x48] sm:$0xff]
        %v208 = vld [vmem:[%s189 + $0x50] sm:$0xff]
        %v209 = vld [vmem:[%s189 + $0x58] sm:$0xff]
        %v210 = vld [vmem:[%s189 + $0x60] sm:$0xff]
        %v211 = vld [vmem:[%s189 + $0x68] sm:$0xff]
        %v212 = vld [vmem:[%s189 + $0x70] sm:$0xff]
        %v213 = vld [vmem:[%s189 + $0x78] sm:$0xff]
        %v214 = vld [vmem:[%s197] sm:$0xff]
        %v215 = vld [vmem:[%s197 + $0x8] sm:$0x1]
        %v216 = vld [vmem:[%s197 + $0x10] sm:$0xff]
        %v217 = vld [vmem:[%s197 + $0x18] sm:$0x1]
        %v218 = vld [vmem:[%s197 + $0x20] sm:$0xff]
        %v219 = vld [vmem:[%s197 + $0x28] sm:$0x1]
        %v220 = vld [vmem:[%s197 + $0x30] sm:$0xff]
        %v221 = vld [vmem:[%s197 + $0x38] sm:$0x1]
        %v222 = vld [vmem:[%s197 + $0x40] sm:$0xff]
        %v223 = vld [vmem:[%s197 + $0x48] sm:$0x1]
        %v224 = vld [vmem:[%s197 + $0x50] sm:$0xff]
        %v225 = vld [vmem:[%s197 + $0x58] sm:$0x1]
        %v226 = vld [vmem:[%s197 + $0x60] sm:$0xff]
        %v227 = vld [vmem:[%s197 + $0x68] sm:$0x1]
        %v228 = vld [vmem:[%s197 + $0x70] sm:$0xff]
        %v229 = vld [vmem:[%s197 + $0x78] sm:$0x1]
        %v230 = vld [vmem:[%s197 + $0x80] sm:$0xff]
        %v231 = vld [vmem:[%s197 + $0x88] sm:$0x1]
        %v232 = vld [vmem:[%s197 + $0x90] sm:$0xff]
        %v233 = vld [vmem:[%s197 + $0x98] sm:$0x1]
        %v234 = vld [vmem:[%s197 + $0xa0] sm:$0xff]
        %v235 = vld [vmem:[%s197 + $0xa8] sm:$0x1]
        %v236 = vld [vmem:[%s197 + $0xb0] sm:$0xff]
        %v237 = vld [vmem:[%s197 + $0xb8] sm:$0x1]
        %v238 = vld [vmem:[%s197 + $0xc0] sm:$0xff]
        %v239 = vld [vmem:[%s197 + $0xc8] sm:$0x1]
        %v240 = vld [vmem:[%s197 + $0xd0] sm:$0xff]
        %v241 = vld [vmem:[%s197 + $0xd8] sm:$0x1]
        %v242 = vld [vmem:[%s197 + $0xe0] sm:$0xff]
        %v243 = vld [vmem:[%s197 + $0xe8] sm:$0x1]
        %v244 = vld [vmem:[%s197 + $0xf0] sm:$0xff]
        %v245 = vld [vmem:[%s197 + $0xf8] sm:$0x1]
        %v246 = vmul.f32 %v198, %v198
        %v247 = vmul.f32 %v199, %v199
        %v248 = vmul.f32 %v200, %v200
        %v249 = vmul.f32 %v201, %v201
        %v250 = vmul.f32 %v202, %v202
        %v251 = vmul.f32 %v203, %v203
        %v252 = vmul.f32 %v204, %v204
        %v253 = vmul.f32 %v205, %v205
        %v254 = vmul.f32 %v206, %v206
        %v255 = vmul.f32 %v207, %v207
        %v256 = vmul.f32 %v208, %v208
        %v257 = vmul.f32 %v209, %v209
        %v258 = vmul.f32 %v210, %v210
        %v259 = vmul.f32 %v211, %v211
        %v260 = vmul.f32 %v212, %v212
        %v261 = vmul.f32 %v213, %v213
        %v262 = vmul.f32 %v214, %v214
        %v263 = vmul.f32 %v215, %v215
        %v264 = vmul.f32 %v216, %v216
        %v265 = vmul.f32 %v217, %v217
        %v266 = vmul.f32 %v218, %v218
        %v267 = vmul.f32 %v219, %v219
        %v268 = vmul.f32 %v220, %v220
        %v269 = vmul.f32 %v221, %v221
        %v270 = vmul.f32 %v222, %v222
        %v271 = vmul.f32 %v223, %v223
        %v272 = vmul.f32 %v224, %v224
        %v273 = vmul.f32 %v225, %v225
        %v274 = vmul.f32 %v226, %v226
        %v275 = vmul.f32 %v227, %v227
        %v276 = vmul.f32 %v228, %v228
        %v277 = vmul.f32 %v229, %v229
        %v278 = vmul.f32 %v230, %v230
        %v279 = vmul.f32 %v231, %v231
        %v280 = vmul.f32 %v232, %v232
        %v281 = vmul.f32 %v233, %v233
        %v282 = vmul.f32 %v234, %v234
        %v283 = vmul.f32 %v235, %v235
        %v284 = vmul.f32 %v236, %v236
        %v285 = vmul.f32 %v237, %v237
        %v286 = vmul.f32 %v238, %v238
        %v287 = vmul.f32 %v239, %v239
        %v288 = vmul.f32 %v240, %v240
        %v289 = vmul.f32 %v241, %v241
        %v290 = vmul.f32 %v242, %v242
        %v291 = vmul.f32 %v243, %v243
        %v292 = vmul.f32 %v244, %v244
        %v293 = vmul.f32 %v245, %v245
        %v294 = vmul.f32 %v262, 0.25
        %v295 = vmul.f32 %v264, 0.25
        %v296 = vmul.f32 %v266, 0.25
        %v297 = vmul.f32 %v268, 0.25
        %v298 = vmul.f32 %v270, 0.25
        %v299 = vmul.f32 %v272, 0.25
        %v300 = vmul.f32 %v274, 0.25
        %v301 = vmul.f32 %v276, 0.25
        %v302 = vmul.f32 %v278, 0.25
        %v303 = vmul.f32 %v280, 0.25
        %v304 = vmul.f32 %v282, 0.25
        %v305 = vmul.f32 %v284, 0.25
        %v306 = vmul.f32 %v286, 0.25
        %v307 = vmul.f32 %v288, 0.25
        %v308 = vmul.f32 %v290, 0.25
        %v309 = vmul.f32 %v292, 0.25
        %v310 = vmul.f32 %v246, 0.5
        %v311 = vmul.f32 %v247, 0.5
        %v312 = vmul.f32 %v248, 0.5
        %v313 = vmul.f32 %v249, 0.5
        %v314 = vmul.f32 %v250, 0.5
        %v315 = vmul.f32 %v251, 0.5
        %v316 = vmul.f32 %v252, 0.5
        %v317 = vmul.f32 %v253, 0.5
        %v318 = vmul.f32 %v254, 0.5
        %v319 = vmul.f32 %v255, 0.5
        %v320 = vmul.f32 %v256, 0.5
        %v321 = vmul.f32 %v257, 0.5
        %v322 = vmul.f32 %v258, 0.5
        %v323 = vmul.f32 %v259, 0.5
        %v324 = vmul.f32 %v260, 0.5
        %v325 = vmul.f32 %v261, 0.5
        %v326 = vadd.f32 %v294, %v310
        %v327 = vadd.f32 %v295, %v311
        %v328 = vadd.f32 %v296, %v312
        %v329 = vadd.f32 %v297, %v313
        %v330 = vadd.f32 %v298, %v314
        %v331 = vadd.f32 %v299, %v315
        %v332 = vadd.f32 %v300, %v316
        %v333 = vadd.f32 %v301, %v317
        %v334 = vadd.f32 %v302, %v318
        %v335 = vadd.f32 %v303, %v319
        %v336 = vadd.f32 %v304, %v320
        %v337 = vadd.f32 %v305, %v321
        %v338 = vadd.f32 %v306, %v322
        %v339 = vadd.f32 %v307, %v323
        %v340 = vadd.f32 %v308, %v324
        %v341 = vadd.f32 %v309, %v325
        %v342 = vmul.f32 %v263, 0.25
        %v343 = vmul.f32 %v265, 0.25
        %v344 = vmul.f32 %v267, 0.25
        %v345 = vmul.f32 %v269, 0.25
        %v346 = vmul.f32 %v271, 0.25
        %v347 = vmul.f32 %v273, 0.25
        %v348 = vmul.f32 %v275, 0.25
        %v349 = vmul.f32 %v277, 0.25
        %v350 = vmul.f32 %v279, 0.25
        %v351 = vmul.f32 %v281, 0.25
        %v352 = vmul.f32 %v283, 0.25
        %v353 = vmul.f32 %v285, 0.25
        %v354 = vmul.f32 %v287, 0.25
        %v355 = vmul.f32 %v289, 0.25
        %v356 = vmul.f32 %v291, 0.25
        %v357 = vmul.f32 %v293, 0.25
        %vm390 = vcmask 1046528
        %v391 = vrot.slane %v294, 1
        %v392 = vrot.slane %v342, 1
        %v393 = vsel %vm390, %v391, %v392
        %v394 = vrot.slane %v295, 1
        %v395 = vrot.slane %v343, 1
        %v396 = vsel %vm390, %v394, %v395
        %v397 = vrot.slane %v296, 1
        %v398 = vrot.slane %v344, 1
        %v399 = vsel %vm390, %v397, %v398
        %v400 = vrot.slane %v297, 1
        %v401 = vrot.slane %v345, 1
        %v402 = vsel %vm390, %v400, %v401
        %v403 = vrot.slane %v298, 1
        %v404 = vrot.slane %v346, 1
        %v405 = vsel %vm390, %v403, %v404
        %v406 = vrot.slane %v299, 1
        %v407 = vrot.slane %v347, 1
        %v408 = vsel %vm390, %v406, %v407
        %v409 = vrot.slane %v300, 1
        %v410 = vrot.slane %v348, 1
        %v411 = vsel %vm390, %v409, %v410
        %v412 = vrot.slane %v301, 1
        %v413 = vrot.slane %v349, 1
        %v414 = vsel %vm390, %v412, %v413
        %v415 = vrot.slane %v302, 1
        %v416 = vrot.slane %v350, 1
        %v417 = vsel %vm390, %v415, %v416
        %v418 = vrot.slane %v303, 1
        %v419 = vrot.slane %v351, 1
        %v420 = vsel %vm390, %v418, %v419
        %v421 = vrot.slane %v304, 1
        %v422 = vrot.slane %v352, 1
        %v423 = vsel %vm390, %v421, %v422
        %v424 = vrot.slane %v305, 1
        %v425 = vrot.slane %v353, 1
        %v426 = vsel %vm390, %v424, %v425
        %v427 = vrot.slane %v306, 1
        %v428 = vrot.slane %v354, 1
        %v429 = vsel %vm390, %v427, %v428
        %v430 = vrot.slane %v307, 1
        %v431 = vrot.slane %v355, 1
        %v432 = vsel %vm390, %v430, %v431
        %v433 = vrot.slane %v308, 1
        %v434 = vrot.slane %v356, 1
        %v435 = vsel %vm390, %v433, %v434
        %v436 = vrot.slane %v309, 1
        %v437 = vrot.slane %v357, 1
        %v438 = vsel %vm390, %v436, %v437
        %v455 = vadd.f32 %v326, %v393
        %v456 = vadd.f32 %v327, %v396
        %v457 = vadd.f32 %v328, %v399
        %v458 = vadd.f32 %v329, %v402
        %v459 = vadd.f32 %v330, %v405
        %v460 = vadd.f32 %v331, %v408
        %v461 = vadd.f32 %v332, %v411
        %v462 = vadd.f32 %v333, %v414
        %v463 = vadd.f32 %v334, %v417
        %v464 = vadd.f32 %v335, %v420
        %v465 = vadd.f32 %v336, %v423
        %v466 = vadd.f32 %v337, %v426
        %v467 = vadd.f32 %v338, %v429
        %v468 = vadd.f32 %v339, %v432
        %v469 = vadd.f32 %v340, %v435
        %v470 = vadd.f32 %v341, %v438
        %v471 = vmul.f32 %v456, 0.25
        %v472 = vmul.f32 %v458, 0.25
        %v473 = vmul.f32 %v460, 0.25
        %v474 = vmul.f32 %v462, 0.25
        %v475 = vmul.f32 %v464, 0.25
        %v476 = vmul.f32 %v466, 0.25
        %v477 = vmul.f32 %v468, 0.25
        %v478 = vmul.f32 %v455, 0.5
        %v479 = vmul.f32 %v457, 0.5
        %v480 = vmul.f32 %v459, 0.5
        %v481 = vmul.f32 %v461, 0.5
        %v482 = vmul.f32 %v463, 0.5
        %v483 = vmul.f32 %v465, 0.5
        %v484 = vmul.f32 %v467, 0.5
        %v485 = vmul.f32 %v469, 0.5
        %v486 = vadd.f32 %v478, 0.0
        %v487 = vadd.f32 %v471, %v479
        %v488 = vadd.f32 %v472, %v480
        %v489 = vadd.f32 %v473, %v481
        %v490 = vadd.f32 %v474, %v482
        %v491 = vadd.f32 %v475, %v483
        %v492 = vadd.f32 %v476, %v484
        %v493 = vadd.f32 %v477, %v485
        %v494 = vmul.f32 %v470, 0.25
        %v495 = vadd.f32 %v486, %v471
        %v496 = vadd.f32 %v487, %v472
        %v497 = vadd.f32 %v488, %v473
        %v498 = vadd.f32 %v489, %v474
        %v499 = vadd.f32 %v490, %v475
        %v500 = vadd.f32 %v491, %v476
        %v501 = vadd.f32 %v492, %v477
        %v502 = vadd.f32 %v493, %v494
        %v503 = vadd.f32 %v495, 1e-12
        %v504 = vadd.f32 %v496, 1e-12
        %v505 = vadd.f32 %v497, 1e-12
        %v506 = vadd.f32 %v498, 1e-12
        %v507 = vadd.f32 %v499, 1e-12
        %v508 = vadd.f32 %v500, 1e-12
        %v509 = vadd.f32 %v501, 1e-12
        %v510 = vadd.f32 %v502, 1e-12
        %v511 = vrsqrt.pop %v503
        %v512 = vmul.f32 %v503, %v511
        %vm513 = vcmp.eq.f32.partialorder %v503, inf
        %v514 = vsel %vm513, %v503, %v512
        %vm515 = vcmp.eq.f32.partialorder %v503, 0.0
        %v516 = vand.u32 %v503, 2147483648
        %v517 = vsel %vm515, %v516, %v514
        %v518 = vrsqrt.pop %v504
        %v519 = vmul.f32 %v504, %v518
        %vm520 = vcmp.eq.f32.partialorder %v504, inf
        %v521 = vsel %vm520, %v504, %v519
        %vm522 = vcmp.eq.f32.partialorder %v504, 0.0
        %v523 = vand.u32 %v504, 2147483648
        %v524 = vsel %vm522, %v523, %v521
        %v525 = vrsqrt.pop %v505
        %v526 = vmul.f32 %v505, %v525
        %vm527 = vcmp.eq.f32.partialorder %v505, inf
        %v528 = vsel %vm527, %v505, %v526
        %vm529 = vcmp.eq.f32.partialorder %v505, 0.0
        %v530 = vand.u32 %v505, 2147483648
        %v531 = vsel %vm529, %v530, %v528
        %v532 = vrsqrt.pop %v506
        %v533 = vmul.f32 %v506, %v532
        %vm534 = vcmp.eq.f32.partialorder %v506, inf
        %v535 = vsel %vm534, %v506, %v533
        %vm536 = vcmp.eq.f32.partialorder %v506, 0.0
        %v537 = vand.u32 %v506, 2147483648
        %v538 = vsel %vm536, %v537, %v535
        %v539 = vrsqrt.pop %v507
        %v540 = vmul.f32 %v507, %v539
        %vm541 = vcmp.eq.f32.partialorder %v507, inf
        %v542 = vsel %vm541, %v507, %v540
        %vm543 = vcmp.eq.f32.partialorder %v507, 0.0
        %v544 = vand.u32 %v507, 2147483648
        %v545 = vsel %vm543, %v544, %v542
        %v546 = vrsqrt.pop %v508
        %v547 = vmul.f32 %v508, %v546
        %vm548 = vcmp.eq.f32.partialorder %v508, inf
        %v549 = vsel %vm548, %v508, %v547
        %vm550 = vcmp.eq.f32.partialorder %v508, 0.0
        %v551 = vand.u32 %v508, 2147483648
        %v552 = vsel %vm550, %v551, %v549
        %v553 = vrsqrt.pop %v509
        %v554 = vmul.f32 %v509, %v553
        %vm555 = vcmp.eq.f32.partialorder %v509, inf
        %v556 = vsel %vm555, %v509, %v554
        %vm557 = vcmp.eq.f32.partialorder %v509, 0.0
        %v558 = vand.u32 %v509, 2147483648
        %v559 = vsel %vm557, %v558, %v556
        %v560 = vrsqrt.pop %v510
        %v561 = vmul.f32 %v510, %v560
        %vm562 = vcmp.eq.f32.partialorder %v510, inf
        %v563 = vsel %vm562, %v510, %v561
        %vm564 = vcmp.eq.f32.partialorder %v510, 0.0
        %v565 = vand.u32 %v510, 2147483648
        %v566 = vsel %vm564, %v565, %v563
        %vm567 = vcmask 523264
        %568 = vst.msk [vmem:[%s181] sm:$0xff] %vm567, %v517
        %569 = vst.msk [vmem:[%s181 + $0x8] sm:$0xff] %vm567, %v524
        %570 = vst.msk [vmem:[%s181 + $0x10] sm:$0xff] %vm567, %v531
        %571 = vst.msk [vmem:[%s181 + $0x18] sm:$0xff] %vm567, %v538
        %572 = vst.msk [vmem:[%s181 + $0x20] sm:$0xff] %vm567, %v545
        %573 = vst.msk [vmem:[%s181 + $0x28] sm:$0xff] %vm567, %v552
        %574 = vst.msk [vmem:[%s181 + $0x30] sm:$0xff] %vm567, %v559
        %575 = vst.msk [vmem:[%s181 + $0x38] sm:$0xff] %vm567, %v566
        %s576 = sand.u32 %s94, 1
        %s577 = scalar_lea.sflag [#allocation3], %s576
        %s578 = sand.u32 %s94, 1
        %s579 = smul.addr %s578, 64
        %s580 = scalar_lea.vmem [#allocation2], %s579
        // Predicated region
        $region29: #{tpu_custom_call.1} parent=27 // pred_check
          %p581 = pneg %p104
        $region30: #{tpu_custom_call.1} parent=27 // pred_check_branch
          %583 = sbr.rel (%p581) target = $region32
        $region31: #{tpu_custom_call.1} parent=27 // pred_region
          %s585 = ssub.s32 1024, 1024
          %586 = vsyncadd %s577, %s585
          %s587 = smul.addr %s20, 8
          %s588 = sadd.s32 %s21, %s587
          %s589 = smul.addr %s588, 128
          %s590 = scalar_lea.hbm %s2, %s589
          %s591 = sshll.u32 %s580, 4
          %s592 = int_to_ptr.vmem [resolvable:$true] %s591
          %597 = dma.vmem_to_hbm [thread:$0]  %s592, 1024, %s590, %s577, 128, 128, 8
        $region32: #{tpu_custom_call.1} parent=27 // pred_fallthru
          _
      $region28: #{tpu_custom_call.1} parent=5 // pred_fallthru
        _
      %p598 = scmp.le.s32.totalorder 2, %s11
      // Predicated region
      $region33: #{tpu_custom_call.1} parent=5 // pred_check
        %p599 = pneg %p598
      $region34: #{tpu_custom_call.1} parent=5 // pred_check_branch
        %601 = sbr.rel (%p599) target = $region36
      $region35: #{tpu_custom_call.1} parent=5 // pred_region
        %s602 = ssub.s32 %s11, 2
        // Predicated region
        $region37: #{tpu_custom_call.1} parent=35 // pred_check
          %p603 = pneg %p110
        $region38: #{tpu_custom_call.1} parent=35 // pred_check_branch
          %605 = sbr.rel (%p603) target = $region40
        $region39: #{tpu_custom_call.1} parent=35 // pred_region
          %s606 = sand.u32 %s95, 1
          %s607 = scalar_lea.sflag [#allocation3], %s606
          %s608 = sand.u32 %s95, 1
          %s609 = smul.addr %s608, 64
          %s610 = scalar_lea.vmem [#allocation2], %s609
          %611 = dma.done %s607, 1024
        $region40: #{tpu_custom_call.1} parent=35 // pred_fallthru
          _
      $region36: #{tpu_custom_call.1} parent=5 // pred_fallthru
        _
    $region6: #{tpu_custom_call.1} parent=1 // loop_footer
      %s15 = sadd.s32 1, %s11
    $region7: #{tpu_custom_call.1} parent=1 // loop_footer_branch
      %10 = sbr.rel target = $region3
    $region8: #{tpu_custom_call.1} parent=1 // loop_exit
      _
    %612 = vsyncpa [#allocation3], 1
    %s613 = scalar_lea.sflag [#allocation3], 1
    %614 = vsyncpa %s613, 1

</llo_original>
